<compile_context>
chip_gen: v7x
topology: tpu7x:2x2x1
jax: 0.10.0
libtpu: 0.0.40
codegen_flags: <defaults>
</compile_context>

<pallas_src>
import functools

import jax
import jax.numpy as jnp
from jax import lax
from jax.experimental import pallas as pl
from jax.experimental.pallas import tpu as pltpu

MARGIN = 2.0
_PAIRWISE_EPS = 1e-6   # PyTorch F.pairwise_distance default eps
_NUM_SPLITS = 2        # leading "parallel" grid axis (both TCs on v7x)


def _contrastive_loss_kernel(o1_ref, o2_ref, lab_ref, out_ref, acc_ref, *,
                             margin, total_rows, tile_b, tiles_per_split):
    c = pl.program_id(0)          # parallel (core-split) axis
    i = pl.program_id(1)          # arbitrary (reduction) axis over batch tiles

    @pl.when(i == 0)
    def _init():
        acc_ref[...] = jnp.zeros_like(acc_ref)

    block_idx = c * tiles_per_split + i
    row_start = pl.multiple_of(block_idx * tile_b, tile_b)

    # squared pairwise L2 distance per row: ||o1 - o2 + eps||^2 -> (tile_b, 1)
    diff = o1_ref[...] - o2_ref[...] + _PAIRWISE_EPS
    sq_sum = jnp.sum(diff * diff, axis=1, keepdims=True)
    dist = jnp.sqrt(sq_sum)       # EUP; only needed for the margin term

    # label stays resident in VMEM for the whole call; slice the current rows
    label = lab_ref[pl.ds(row_start, tile_b), :]          # (tile_b, 1)
    pos_term = (1.0 - label) * sq_sum                     # == (1 - y) * d**2
    neg_term = label * jnp.square(jnp.maximum(margin - dist, 0.0))
    per_row = pos_term + neg_term

    # mask rows that are batch padding
    row_ids = row_start + lax.broadcasted_iota(jnp.int32, (tile_b, 1), 0)
    per_row = jnp.where(row_ids < total_rows, per_row, 0.0)

    acc_ref[...] += per_row       # vector partials; scalar reduce deferred

    @pl.when(i == pl.num_programs(1) - 1)
    def _finalize():
        # single cross-sublane reduce per core-split, broadcast into the
        # lane-dense (8, 128) output block
        out_ref[...] = jnp.zeros_like(out_ref) + jnp.sum(acc_ref[...])


def contrastive_loss(output1, output2, label, *, margin=MARGIN,
                     target_block_bytes=2 << 20, num_splits=_NUM_SPLITS):
    """output1, output2: (B, D); label: (B, 1). Returns scalar f32 loss."""
    B, D = output1.shape
    assert output2.shape == (B, D)
    assert label.shape == (B, 1)

    o1 = output1.astype(jnp.float32)
    o2 = output2.astype(jnp.float32)
    lab = label.astype(jnp.float32)

    # --- tile sizing: biggest batch tile with <= target_block_bytes / input ---
    rows = max(8, ((target_block_bytes // (D * 4)) // 8) * 8)
    b_ceil = ((B + 7) // 8) * 8
    tile_b = int(min(rows, max(8, b_ceil)))

    tiles_total = pl.cdiv(B, tile_b)
    tiles_per_split = int(pl.cdiv(tiles_total, num_splits))
    B_pad = num_splits * tiles_per_split * tile_b

    if B_pad != B:
        pad = ((0, B_pad - B), (0, 0))
        o1 = jnp.pad(o1, pad)
        o2 = jnp.pad(o2, pad)
        lab = jnp.pad(lab, pad)

    # --- VMEM budget: double-buffered inputs + resident label + out/scratch ---
    block_bytes = tile_b * D * 4
    vmem_need = (4 * block_bytes        # 2 inputs x 2 pipeline buffers
                 + 2 * B_pad * 4        # resident label (conservative x2)
                 + 2 * 8 * 128 * 4      # output block
                 + tile_b * 4)          # accumulator scratch
    vmem_limit = int(min(max(vmem_need + (4 << 20), 16 << 20), 48 << 20))

    kernel = functools.partial(
        _contrastive_loss_kernel, margin=float(margin), total_rows=B,
        tile_b=tile_b, tiles_per_split=tiles_per_split)

    cost = pl.CostEstimate(
        flops=int(B * (4 * D + 12)),
        transcendentals=int(B),
        bytes_accessed=int(2 * B_pad * D * 4 + B_pad * 4
                           + num_splits * 8 * 128 * 4),
    )

    out = pl.pallas_call(
        kernel,
        out_shape=jax.ShapeDtypeStruct((num_splits * 8, 128), jnp.float32),
        grid_spec=pltpu.PrefetchScalarGridSpec(
            num_scalar_prefetch=0,
            grid=(num_splits, tiles_per_split),
            in_specs=[
                pl.BlockSpec((tile_b, D),
                             lambda c, i: (c * tiles_per_split + i, 0)),
                pl.BlockSpec((tile_b, D),
                             lambda c, i: (c * tiles_per_split + i, 0)),
                # whole label resident in VMEM (single DMA for the whole call)
                pl.BlockSpec((B_pad, 1), lambda c, i: (0, 0)),
            ],
            out_specs=pl.BlockSpec((8, 128), lambda c, i: (c, 0)),
            scratch_shapes=[pltpu.VMEM((tile_b, 1), jnp.float32)],
        ),
        compiler_params=pltpu.CompilerParams(
            dimension_semantics=("parallel", "arbitrary"),
            vmem_limit_bytes=vmem_limit),
        cost_estimate=cost,
    )(o1, o2, lab)

    partials = out.reshape(num_splits, 8, 128)[:, 0, 0]
    return jnp.sum(partials) / jnp.float32(B)


def _contrastive_loss_ref(o1, o2, label, margin=MARGIN):
    diff = o1 - o2 + _PAIRWISE_EPS
    d = jnp.sqrt(jnp.sum(diff * diff, axis=1, keepdims=True))
    return jnp.mean((1.0 - label) * d ** 2
                    + label * jnp.square(jnp.clip(margin - d, 0.0, None)))


if __name__ == "__main__":
    key = jax.random.PRNGKey(0)
    k1, k2, k3 = jax.random.split(key, 3)

    B, D = 16, 32  # small shapes consistent with embedding pairs
    output1 = jax.random.normal(k1, (B, D), dtype=jnp.float32)
    output2 = jax.random.normal(k2, (B, D), dtype=jnp.float32)
    label = jax.random.bernoulli(k3, 0.5, (B, 1)).astype(jnp.float32)

    loss = jax.block_until_ready(contrastive_loss(output1, output2, label))
    ref = jax.block_until_ready(_contrastive_loss_ref(output1, output2, label))

    assert jnp.allclose(loss, ref, rtol=1e-5, atol=1e-5), (loss, ref)
    print("KERNEL_OK")
</pallas_src>

<mosaic_0001>
module attributes {stable_mosaic.version = 11 : i64} {
  func.func @_contrastive_loss_kernel(%arg0: i32, %arg1: i32, %arg2: memref<16x32xf32, #tpu.memory_space<vmem>>, %arg3: memref<16x32xf32, #tpu.memory_space<vmem>>, %arg4: memref<32x1xf32, #tpu.memory_space<vmem>>, %arg5: memref<8x128xf32, #tpu.memory_space<vmem>>, %arg6: memref<16x1xf32, #tpu.memory_space<vmem>>) attributes {dimension_semantics = [#tpu.dimension_semantics<parallel>, #tpu.dimension_semantics<arbitrary>], iteration_bounds = array<i64: 2, 1>, scalar_prefetch = 0 : i64, scratch_operands = 1 : i64, tpu.core_type = #tpu.core_type<tc>, window_params = [{transform_indices = @transform_0, window_bounds = array<i64: 16, 32>}, {transform_indices = @transform_1, window_bounds = array<i64: 16, 32>}, {pipeline_mode = #tpu.pipeline_mode<synchronous>, transform_indices = @transform_2, window_bounds = array<i64: 32, 1>}, {transform_indices = @transform_3, window_bounds = array<i64: 8, 128>}]} {
    %c0_i32 = arith.constant 0 : i32
    %0 = arith.cmpi eq, %arg1, %c0_i32 : i32
    %1 = arith.extui %0 : i1 to i32
    %c0_i32_0 = arith.constant 0 : i32
    %2 = arith.cmpi ne, %1, %c0_i32_0 : i32
    scf.if %2 {
      %cst_17 = arith.constant 0.000000e+00 : f32
      %41 = vector.broadcast %cst_17 : f32 to vector<16x1xf32>
      %c0_18 = arith.constant 0 : index
      %c0_19 = arith.constant 0 : index
      %42 = vector.load %arg6[%c0_18, %c0_19] : memref<16x1xf32, #tpu.memory_space<vmem>>, vector<16x1xf32>
      tpu.vector_store %arg6[%c0_18, %c0_19], %41 {strides = array<i32>} : memref<16x1xf32, #tpu.memory_space<vmem>>, vector<16x1xf32>,
    } else {
    }
    %c1_i32 = arith.constant 1 : i32
    %3 = arith.muli %arg0, %c1_i32 : i32
    %4 = arith.addi %3, %arg1 : i32
    %c16_i32 = arith.constant 16 : i32
    %5 = arith.muli %4, %c16_i32 : i32
    %6 = tpu.assume_multiple %5, 16 : i32
    %c0 = arith.constant 0 : index
    %c0_1 = arith.constant 0 : index
    %7 = vector.load %arg2[%c0, %c0_1] : memref<16x32xf32, #tpu.memory_space<vmem>>, vector<16x32xf32>
    %c0_2 = arith.constant 0 : index
    %c0_3 = arith.constant 0 : index
    %8 = vector.load %arg3[%c0_2, %c0_3] : memref<16x32xf32, #tpu.memory_space<vmem>>, vector<16x32xf32>
    %9 = arith.subf %7, %8 : vector<16x32xf32>
    %cst = arith.constant 9.99999997E-7 : f32
    %10 = vector.broadcast %cst : f32 to vector<16x32xf32>
    %11 = arith.addf %9, %10 : vector<16x32xf32>
    %12 = arith.mulf %11, %11 : vector<16x32xf32>
    %cst_4 = arith.constant dense<0.000000e+00> : vector<16xf32>
    %13 = vector.multi_reduction <add>, %12, %cst_4 [1] : vector<16x32xf32> to vector<16xf32>
    %14 = vector.shape_cast %13 : vector<16xf32> to vector<16x1xf32>
    %15 = math.sqrt %14 : vector<16x1xf32>
    %16 = arith.index_cast %6 : i32 to index
    %c0_5 = arith.constant 0 : index
    %17 = vector.load %arg4[%16, %c0_5] : memref<32x1xf32, #tpu.memory_space<vmem>>, vector<16x1xf32>
    %cst_6 = arith.constant 1.000000e+00 : f32
    %18 = vector.broadcast %cst_6 : f32 to vector<16x1xf32>
    %19 = arith.subf %18, %17 : vector<16x1xf32>
    %20 = arith.mulf %19, %14 : vector<16x1xf32>
    %cst_7 = arith.constant 2.000000e+00 : f32
    %21 = vector.broadcast %cst_7 : f32 to vector<16x1xf32>
    %22 = arith.subf %21, %15 : vector<16x1xf32>
    %cst_8 = arith.constant 0.000000e+00 : f32
    %23 = vector.broadcast %cst_8 : f32 to vector<16x1xf32>
    %24 = arith.maximumf %22, %23 : vector<16x1xf32>
    %25 = arith.mulf %24, %24 : vector<16x1xf32>
    %26 = arith.mulf %17, %25 : vector<16x1xf32>
    %27 = arith.addf %20, %26 : vector<16x1xf32>
    %28 = tpu.iota {dimensions = array<i32: 0>} : vector<16x1xi32>
    %29 = vector.broadcast %6 : i32 to vector<16x1xi32>
    %30 = arith.addi %29, %28 : vector<16x1xi32>
    %c16_i32_9 = arith.constant 16 : i32
    %31 = vector.broadcast %c16_i32_9 : i32 to vector<16x1xi32>
    %32 = arith.cmpi slt, %30, %31 : vector<16x1xi32>
    %cst_10 = arith.constant 0.000000e+00 : f32
    %33 = vector.broadcast %cst_10 : f32 to vector<16x1xf32>
    %34 = arith.select %32, %27, %33 : vector<16x1xi1>, vector<16x1xf32>
    %c0_11 = arith.constant 0 : index
    %c0_12 = arith.constant 0 : index
    %35 = vector.load %arg6[%c0_11, %c0_12] : memref<16x1xf32, #tpu.memory_space<vmem>>, vector<16x1xf32>
    %36 = arith.addf %35, %34 : vector<16x1xf32>
    %c0_13 = arith.constant 0 : index
    %c0_14 = arith.constant 0 : index
    %37 = vector.load %arg6[%c0_13, %c0_14] : memref<16x1xf32, #tpu.memory_space<vmem>>, vector<16x1xf32>
    tpu.vector_store %arg6[%c0_13, %c0_14], %36 {strides = array<i32>} : memref<16x1xf32, #tpu.memory_space<vmem>>, vector<16x1xf32>,
    %c0_i32_15 = arith.constant 0 : i32
    %38 = arith.cmpi eq, %arg1, %c0_i32_15 : i32
    %39 = arith.extui %38 : i1 to i32
    %c0_i32_16 = arith.constant 0 : i32
    %40 = arith.cmpi ne, %39, %c0_i32_16 : i32
    scf.if %40 {
      %cst_17 = arith.constant 0.000000e+00 : f32
      %41 = vector.broadcast %cst_17 : f32 to vector<8x128xf32>
      %c0_18 = arith.constant 0 : index
      %c0_19 = arith.constant 0 : index
      %42 = vector.load %arg6[%c0_18, %c0_19] : memref<16x1xf32, #tpu.memory_space<vmem>>, vector<16x1xf32>
      %43 = vector.shape_cast %42 : vector<16x1xf32> to vector<1x16x1xf32>
      %cst_20 = arith.constant dense<0.000000e+00> : vector<1xf32>
      %44 = vector.multi_reduction <add>, %43, %cst_20 [1, 2] : vector<1x16x1xf32> to vector<1xf32>
      %45 = vector.shape_cast %44 : vector<1xf32> to vector<1x1x1xf32>
      %46 = vector.extract %45[0, 0, 0] : f32 from vector<1x1x1xf32>
      %47 = vector.broadcast %46 : f32 to vector<8x128xf32>
      %48 = arith.addf %41, %47 : vector<8x128xf32>
      %c0_21 = arith.constant 0 : index
      %c0_22 = arith.constant 0 : index
      %49 = vector.load %arg5[%c0_21, %c0_22] : memref<8x128xf32, #tpu.memory_space<vmem>>, vector<8x128xf32>
      tpu.vector_store %arg5[%c0_21, %c0_22], %48 {strides = array<i32>} : memref<8x128xf32, #tpu.memory_space<vmem>>, vector<8x128xf32>,
    } else {
    }
    return
  }
  func.func @transform_0(%arg0: i32, %arg1: i32) -> (i32, i32) {
    %c1_i32 = arith.constant 1 : i32
    %0 = arith.muli %arg0, %c1_i32 : i32
    %1 = arith.addi %0, %arg1 : i32
    %c0_i32 = arith.constant 0 : i32
    %c0_i32_0 = arith.constant 0 : i32
    return %1, %c0_i32 : i32, i32
  }
  func.func @transform_1(%arg0: i32, %arg1: i32) -> (i32, i32) {
    %c1_i32 = arith.constant 1 : i32
    %0 = arith.muli %arg0, %c1_i32 : i32
    %1 = arith.addi %0, %arg1 : i32
    %c0_i32 = arith.constant 0 : i32
    %c0_i32_0 = arith.constant 0 : i32
    return %1, %c0_i32 : i32, i32
  }
  func.func @transform_2(%arg0: i32, %arg1: i32) -> (i32, i32) {
    %c0_i32 = arith.constant 0 : i32
    %c0_i32_0 = arith.constant 0 : i32
    %c0_i32_1 = arith.constant 0 : i32
    return %c0_i32, %c0_i32_0 : i32, i32
  }
  func.func @transform_3(%arg0: i32, %arg1: i32) -> (i32, i32) {
    %c0_i32 = arith.constant 0 : i32
    %c0_i32_0 = arith.constant 0 : i32
    return %arg0, %c0_i32 : i32, i32
  }
}

</mosaic_0001>

<llo_original>
// kernel: tpu_custom_call.1
$region0: #{tpu_custom_call.1}
  #allocation0 [shape = 'u32[]', space=smem, size = 0x4, offset = 0x4, fixed_abs, tag = 'smem constant byte address 0x4 - core index']
  #allocation1 [shape = 'u32[144,128]{1,0:T(1,128)}', space=vmem, size = 0x12000, scoped, tag = 'internal scratch']
  #allocation2 [shape = 'f32[16,1]{1,0:T(8,128)}', space=vmem, size = 0x2000, scoped, tag = 'scratch operand']
  %s0 = inlined_call_operand.vmem [shape: f32[32,32], index: 0, kind: input, shape index: {}]
  %s1 = inlined_call_operand.hbm [shape: f32[32,32], index: 1, kind: input, shape index: {}]
  %s2 = inlined_call_operand.vmem [shape: f32[32,1], index: 2, kind: input, shape index: {}]
  %s3 = inlined_call_operand.hbm [shape: f32[16,128], index: 3, kind: output, shape index: {}]
  %s4 = sld [smem:[#allocation0]]
  $region57: #{tpu_custom_call.1} parent=0
    _
  %s6 = ssub.s32 1, %s4
  %s7 = scalar_select 0, %s6, %s4
  $region1: #{tpu_custom_call.1} parent=0
    #allocation3 [shape = 'u8[16384]{0}', space=vmem, size = 0x4000, scoped, tag = 'input window, operand 1']
    #allocation4 [shape = 's32[2]{0}', space=sflag, size = 0x8, scoped, tag = 'scoped memory for tpu_custom_call.1']
    #allocation5 [shape = 's32[2]{0}', space=sflag, size = 0x8, scoped, tag = 'scoped memory for tpu_custom_call.1']
    #allocation6 [shape = 'u8[8192]{0}', space=vmem, size = 0x2000, scoped, tag = 'output window, operand 0']
    %8 = vsyncpa [#allocation4], 0
    %s9 = scalar_lea.sflag [#allocation4], 1
    %10 = vsyncpa %s9, 0
    %11 = vsyncpa [#allocation5], 0
    %s12 = scalar_lea.sflag [#allocation5], 1
    %13 = vsyncpa %s12, 0
    loop: start=0, step=1, limit=4
    $region2: #{tpu_custom_call.1} parent=1 // loop_pre_header
      _
    $region3: #{tpu_custom_call.1} parent=1 // loop_header
      %s15 = sphi 0, %s19
      %p16 = scmp.ge.s32.totalorder %s15, 4
      %s22 = sphi 0, %s34
      %s23 = sphi 0, %s30
      %s24 = sphi 0, %s22
      %s25 = sphi 0, %s23
      %s26 = sphi 0, %s24
      %s27 = sphi 0, %s25
      %s39 = sphi 0, %s41
      %s42 = sphi 0, %s39
      %s43 = sphi 0, %s42
      %s59 = sphi 0, %s43
      %s67 = sphi 0, %s69
      %s70 = sphi 0, %s67
      %s71 = sphi 0, %s70
      %s87 = sphi 0, %s71
      %s91 = sphi 0, %s91
      %s93 = sphi 0, %s91
      %s94 = sphi 0, %s93
      %s108 = sphi 0, %s94
      %s114 = sphi 0, %s116
      %s117 = sphi 0, %s114
      %s118 = sphi 0, %s117
      %s134 = sphi 0, %s118
    $region4: #{tpu_custom_call.1} parent=1 // loop_header_branch
      %18 = sbr.rel (%p16) target = $region8
    $region5: #{tpu_custom_call.1} parent=1 // loop_body
      %s20 = ssub.s32 %s15, 1
      %s21 = ssub.s32 %s15, 2
      %s28 = sadd.s32 1, %s23
      %p29 = scmp.ge.s32.totalorder %s28, 1
      %s30 = scalar_select %p29, 0, %s28
      %s31 = sadd.s32 1, %s22
      %s32 = scalar_select %p29, %s31, %s22
      %p33 = scmp.ge.s32.totalorder %s32, 2
      %s34 = scalar_select %p33, 0, %s32
      %s35 = sadd.s32 %s22, %s23
      %s36 = sadd.s32 %s34, %s30
      %s37 = ssub.s32 %s35, %s36
      %p38 = scmp.eq.s32.totalorder %s37, 0
      %s40 = sadd.s32 %s39, 1
      %s41 = scalar_select %p38, %s39, %s40
      %p44 = pneg %p38
      %p45 = scmp.eq.s32.totalorder %s15, 1
      %p46 = por %p44, %p45
      %p47 = scmp.ne.s32.totalorder %s39, %s42
      %p48 = scmp.eq.s32.totalorder %s15, 0
      %p49 = por %p47, %p48
      %p50 = scmp.ne.s32.totalorder %s39, %s42
      %p51 = scmp.eq.s32.totalorder %s20, 1
      %p52 = por %p50, %p51
      %p53 = scmp.ne.s32.totalorder %s42, %s43
      %p54 = scmp.eq.s32.totalorder %s20, 0
      %p55 = por %p53, %p54
      %p56 = scmp.ne.s32.totalorder %s42, %s43
      %p57 = scmp.eq.s32.totalorder %s21, 1
      %p58 = por %p56, %p57
      %p60 = scmp.ne.s32.totalorder %s43, %s59
      %p61 = scmp.eq.s32.totalorder %s21, 0
      %p62 = por %p60, %p61
      %s63 = sadd.s32 %s22, %s23
      %s64 = sadd.s32 %s34, %s30
      %s65 = ssub.s32 %s63, %s64
      %p66 = scmp.eq.s32.totalorder %s65, 0
      %s68 = sadd.s32 %s67, 1
      %s69 = scalar_select %p66, %s67, %s68
      %p72 = pneg %p66
      %p73 = scmp.eq.s32.totalorder %s15, 1
      %p74 = por %p72, %p73
      %p75 = scmp.ne.s32.totalorder %s67, %s70
      %p76 = scmp.eq.s32.totalorder %s15, 0
      %p77 = por %p75, %p76
      %p78 = scmp.ne.s32.totalorder %s67, %s70
      %p79 = scmp.eq.s32.totalorder %s20, 1
      %p80 = por %p78, %p79
      %p81 = scmp.ne.s32.totalorder %s70, %s71
      %p82 = scmp.eq.s32.totalorder %s20, 0
      %p83 = por %p81, %p82
      %p84 = scmp.ne.s32.totalorder %s70, %s71
      %p85 = scmp.eq.s32.totalorder %s21, 1
      %p86 = por %p84, %p85
      %p88 = scmp.ne.s32.totalorder %s71, %s87
      %p89 = scmp.eq.s32.totalorder %s21, 0
      %p90 = por %p88, %p89
      %s92 = sadd.s32 %s91, 1
      %p95 = scmp.eq.s32.totalorder %s15, 1
      %p96 = scmp.ne.s32.totalorder %s91, %s93
      %p97 = scmp.eq.s32.totalorder %s15, 0
      %p98 = por %p96, %p97
      %p99 = scmp.ne.s32.totalorder %s91, %s93
      %p100 = scmp.eq.s32.totalorder %s20, 1
      %p101 = por %p99, %p100
      %p102 = scmp.ne.s32.totalorder %s93, %s94
      %p103 = scmp.eq.s32.totalorder %s20, 0
      %p104 = por %p102, %p103
      %p105 = scmp.ne.s32.totalorder %s93, %s94
      %p106 = scmp.eq.s32.totalorder %s21, 1
      %p107 = por %p105, %p106
      %p109 = scmp.ne.s32.totalorder %s94, %s108
      %p110 = scmp.eq.s32.totalorder %s21, 0
      %p111 = por %p109, %p110
      %s112 = ssub.s32 %s22, %s34
      %p113 = scmp.eq.s32.totalorder %s112, 0
      %s115 = sadd.s32 %s114, 1
      %s116 = scalar_select %p113, %s114, %s115
      %p119 = pneg %p113
      %p120 = scmp.eq.s32.totalorder %s15, 1
      %p121 = por %p119, %p120
      %p122 = scmp.ne.s32.totalorder %s114, %s117
      %p123 = scmp.eq.s32.totalorder %s15, 0
      %p124 = por %p122, %p123
      %p125 = scmp.ne.s32.totalorder %s114, %s117
      %p126 = scmp.eq.s32.totalorder %s20, 1
      %p127 = por %p125, %p126
      %p128 = scmp.ne.s32.totalorder %s117, %s118
      %p129 = scmp.eq.s32.totalorder %s20, 0
      %p130 = por %p128, %p129
      %p131 = scmp.ne.s32.totalorder %s117, %s118
      %p132 = scmp.eq.s32.totalorder %s21, 1
      %p133 = por %p131, %p132
      %p135 = scmp.ne.s32.totalorder %s118, %s134
      %p136 = scmp.eq.s32.totalorder %s21, 0
      %p137 = por %p135, %p136
      %p138 = scmp.le.s32.totalorder 1, %s15
      %p139 = scmp.lt.s32.totalorder %s15, 3
      %p140 = pnand %p138, %p139
      %p141 = pneg %p140
      // Predicated region
      $region9: #{tpu_custom_call.1} parent=5 // pred_check
        _
      $region10: #{tpu_custom_call.1} parent=5 // pred_check_branch
        %143 = sbr.rel (%p140) target = $region12
      $region11: #{tpu_custom_call.1} parent=5 // pred_region
        %s144 = ssub.s32 %s15, 1
        // Predicated region
        $region13: #{tpu_custom_call.1} parent=11 // pred_check
          %p145 = pneg %p104
        $region14: #{tpu_custom_call.1} parent=11 // pred_check_branch
          %147 = sbr.rel (%p145) target = $region16
        $region15: #{tpu_custom_call.1} parent=11 // pred_region
          _
        $region16: #{tpu_custom_call.1} parent=11 // pred_fallthru
          _
      $region12: #{tpu_custom_call.1} parent=5 // pred_fallthru
        _
      %p148 = scmp.lt.s32.totalorder %s15, 2
      // Predicated region
      $region17: #{tpu_custom_call.1} parent=5 // pred_check
        %p149 = pneg %p148
      $region18: #{tpu_custom_call.1} parent=5 // pred_check_branch
        %151 = sbr.rel (%p149) target = $region20
      $region19: #{tpu_custom_call.1} parent=5 // pred_region
        // Predicated region
        $region21: #{tpu_custom_call.1} parent=19 // pred_check
          %p152 = pneg %p49
        $region22: #{tpu_custom_call.1} parent=19 // pred_check_branch
          %154 = sbr.rel (%p152) target = $region24
        $region23: #{tpu_custom_call.1} parent=19 // pred_region
          %s155 = sadd.s32 %s22, %s23
          %s156 = smul.u32 2, %s155
          %p157 = scmp.lt.s32.totalorder %s156, 3
          %s158 = scalar_select %p157, %s156, 3
          %s159 = smul.addr %s158, 8
          %s160 = scalar_lea.vmem %s0, %s159
          %s161 = sadd.s32 %s22, %s23
          %s162 = smul.u32 2, %s161
        $region24: #{tpu_custom_call.1} parent=19 // pred_fallthru
          _
        // Predicated region
        $region25: #{tpu_custom_call.1} parent=19 // pred_check
          %p163 = pneg %p77
        $region26: #{tpu_custom_call.1} parent=19 // pred_check_branch
          %165 = sbr.rel (%p163) target = $region28
        $region27: #{tpu_custom_call.1} parent=19 // pred_region
          %s166 = sand.u32 %s67, 1
          %s167 = scalar_lea.sflag [#allocation4], %s166
          %s168 = sand.u32 %s67, 1
          %s169 = smul.addr %s168, 16
          %s170 = scalar_lea.vmem [#allocation3], %s169
          %s171 = sadd.s32 %s22, %s23
          %s172 = smul.u32 2, %s171
          %s174 = ssub.s32 256, 256
          %175 = vsyncadd %s167, %s174
          %s176 = smul.addr %s172, 128
          %s177 = scalar_lea.hbm %s1, %s176
          %s178 = sshll.u32 %s170, 4
          %s179 = int_to_ptr.vmem [resolvable:$true] %s178
          %184 = dma.hbm_to_vmem [thread:$0]  %s177, 256, %s179, %s167, 128, 128, 8
        $region28: #{tpu_custom_call.1} parent=19 // pred_fallthru
          _
      $region20: #{tpu_custom_call.1} parent=5 // pred_fallthru
        _
      %p185 = scmp.le.s32.totalorder 1, %s15
      %p186 = scmp.lt.s32.totalorder %s15, 3
      %p187 = pnand %p185, %p186
      %p188 = pneg %p187
      // Predicated region
      $region29: #{tpu_custom_call.1} parent=5 // pred_check
        _
      $region30: #{tpu_custom_call.1} parent=5 // pred_check_branch
        %190 = sbr.rel (%p187) target = $region32
      $region31: #{tpu_custom_call.1} parent=5 // pred_region
        %s191 = ssub.s32 %s15, 1
        %s192 = sand.u32 %s70, 1
        %s193 = scalar_lea.sflag [#allocation4], %s192
        %s194 = sand.u32 %s70, 1
        %s195 = smul.addr %s194, 16
        %s196 = scalar_lea.vmem [#allocation3], %s195
        // Predicated region
        $region33: #{tpu_custom_call.1} parent=31 // pred_check
          %p197 = pneg %p83
        $region34: #{tpu_custom_call.1} parent=31 // pred_check_branch
          %199 = sbr.rel (%p197) target = $region36
        $region35: #{tpu_custom_call.1} parent=31 // pred_region
          %200 = dma.done %s193, 256
        $region36: #{tpu_custom_call.1} parent=31 // pred_fallthru
          _
        %s201 = sadd.s32 %s24, %s25
        %s202 = smul.u32 2, %s201
        %p203 = scmp.lt.s32.totalorder %s202, 3
        %s204 = scalar_select %p203, %s202, 3
        %s205 = smul.addr %s204, 8
        %s206 = scalar_lea.vmem %s0, %s205
        %p207 = pneg %p55
        %p208 = pneg %p52
        %s209 = sand.u32 %s70, 1
        %s210 = scalar_lea.sflag [#allocation4], %s209
        %s211 = sand.u32 %s70, 1
        %s212 = smul.addr %s211, 16
        %s213 = scalar_lea.vmem [#allocation3], %s212
        %p214 = pneg %p83
        %p215 = pneg %p80
        %p216 = pneg %p104
        %p217 = pneg %p101
        %p218 = pneg %p130
        %p219 = pneg %p127
        %s220 = sand.u32 %s117, 1
        %s221 = scalar_lea.sflag [#allocation5], %s220
        %s222 = sand.u32 %s117, 1
        %s223 = smul.addr %s222, 8
        %s224 = scalar_lea.vmem [#allocation6], %s223
        %s225 = sadd.s32 %s24, %s25
        %s226 = smul.u32 2, %s225
        %p227 = scmp.lt.s32.totalorder %s226, 3
        %s228 = scalar_select %p227, %s226, 3
        %s229 = smul.addr %s228, 8
        %s230 = scalar_lea.vmem %s0, %s229
        %s231 = sadd.s32 %s24, %s25
        %s232 = smul.u32 2, %s231
        %s233 = sadd.s32 %s24, %s25
        %s234 = smul.u32 2, %s233
        %p235 = scmp.eq.s32.totalorder %s25, 0
        // Predicated region
        $region37: #{tpu_custom_call.1} parent=31 // pred_check
          %p236 = pneg %p235
        $region38: #{tpu_custom_call.1} parent=31 // pred_check_branch
          %238 = sbr.rel (%p236) target = $region40
        $region39: #{tpu_custom_call.1} parent=31 // pred_region
          %vm239 = vcmask 7168
          %240 = vst.msk [vmem:[#allocation2] sm:$0xff] %vm239, 0.0
          %241 = vst.msk [vmem:[#allocation2 + $0x8] sm:$0xff] %vm239, 0.0
        $region40: #{tpu_custom_call.1} parent=31 // pred_fallthru
          _
        %s242 = sadd.s32 %s24, %s25
        %s243 = smul.u32 %s242, 16
        %v244 = vld [vmem:[%s230] sm:$0xff]
        %v245 = vld [vmem:[%s230 + $0x8] sm:$0xff]
        %v246 = vld [vmem:[%s196] sm:$0xff]
        %v247 = vld [vmem:[%s196 + $0x8] sm:$0xff]
        %v248 = vsub.f32 %v244, %v246
        %v249 = vsub.f32 %v245, %v247
        %v250 = vadd.f32 %v248, 1e-06
        %v251 = vadd.f32 %v249, 1e-06
        %v252 = vmul.f32 %v250, %v250
        %v253 = vmul.f32 %v251, %v251
        %vm254 = vcmask 261120
        %v255 = vsel %vm254, %v252, 0.0
        %256 = vadd.xlane.f32.xlu0 %v255
        %v257 = vpop.xlane.xlu0 %256
        %v258 = vsel %vm254, %v253, 0.0
        %259 = vadd.xlane.f32.xlu0 %v258
        %v260 = vpop.xlane.xlu0 %259
        %v261 = vrsqrt.pop %v257
        %v262 = vmul.f32 %v257, %v261
        %vm263 = vcmp.eq.f32.partialorder %v257, inf
        %v264 = vsel %vm263, %v257, %v262
        %vm265 = vcmp.eq.f32.partialorder %v257, 0.0
        %v266 = vand.u32 %v257, 2147483648
        %v267 = vsel %vm265, %v266, %v264
        %v268 = vrsqrt.pop %v260
        %v269 = vmul.f32 %v260, %v268
        %vm270 = vcmp.eq.f32.partialorder %v260, inf
        %v271 = vsel %vm270, %v260, %v269
        %vm272 = vcmp.eq.f32.partialorder %v260, 0.0
        %v273 = vand.u32 %v260, 2147483648
        %v274 = vsel %vm272, %v273, %v271
        %s275 = scalar_lea.vmem %s2, %s243
        %v276 = vld [vmem:[%s275] sm:$0xff]
        %v277 = vld [vmem:[%s275 + $0x8] sm:$0xff]
        %v278 = vsub.f32 1.0, %v276
        %v279 = vsub.f32 1.0, %v277
        %v280 = vmul.f32 %v278, %v257
        %v281 = vmul.f32 %v279, %v260
        %v282 = vsub.f32 2.0, %v267
        %v283 = vsub.f32 2.0, %v274
        %v284 = vmax.f32 %v282, 0.0
        %v285 = vmax.f32 %v283, 0.0
        %v286 = vmul.f32 %v284, %v284
        %v287 = vmul.f32 %v285, %v285
        %v288 = vmul.f32 %v276, %v286
        %v289 = vmul.f32 %v277, %v287
        %v290 = vadd.f32 %v280, %v288
        %v291 = vadd.f32 %v281, %v289
        %v292 = vlaneseq
        %v293 = vshrl.u32 %v292, 7
        %v294 = vadd.s32 %v293, 8
        %v295 = vstv %s243
        %v296 = vadd.s32 %v295, %v293
        %v297 = vadd.s32 %v295, %v294
        %vm298 = vcmp.lt.s32.totalorder %v296, 16
        %vm299 = vcmp.lt.s32.totalorder %v297, 16
        %v300 = vsel %vm298, %v290, 0.0
        %v301 = vsel %vm299, %v291, 0.0
        %v302 = vld [vmem:[#allocation2] sm:$0xff]
        %v303 = vld [vmem:[#allocation2 + $0x8] sm:$0xff]
        %v304 = vadd.f32 %v302, %v300
        %v305 = vadd.f32 %v303, %v301
        %vm306 = vcmask 7168
        %307 = vst.msk [vmem:[#allocation2] sm:$0xff] %vm306, %v304
        %308 = vst.msk [vmem:[#allocation2 + $0x8] sm:$0xff] %vm306, %v305
        // Predicated region
        $region41: #{tpu_custom_call.1} parent=31 // pred_check
          %p309 = pneg %p235
        $region42: #{tpu_custom_call.1} parent=31 // pred_check_branch
          %311 = sbr.rel (%p309) target = $region44
        $region43: #{tpu_custom_call.1} parent=31 // pred_region
          %v312 = vld [vmem:[#allocation2] sm:$0xff]
          %v313 = vld [vmem:[#allocation2 + $0x8] sm:$0xff]
          %v314 = vsel %vm306, %v312, 0.0
          %v315 = vsel %vm306, %v313, 0.0
          %v316 = vadd.f32 %v314, %v315
          %317 = vadd.xlane.f32.xlu0 %v316
          %v318 = vpop.xlane.xlu0 %317
          %v319 = vrot.slane %v318, 4
          %v320 = vadd.f32 %v318, %v319
          %v321 = vrot.slane %v320, 2
          %v322 = vadd.f32 %v320, %v321
          %v323 = vrot.slane %v322, 1
          %v324 = vadd.f32 %v322, %v323
          %s325 = vtos %v324
          %v326 = vstv %s325
          %v327 = vadd.f32 %v326, 0.0
          %328 = vst [vmem:[%s224] sm:$0xff] %v327
        $region44: #{tpu_custom_call.1} parent=31 // pred_fallthru
          _
        %s329 = sand.u32 %s117, 1
        %s330 = scalar_lea.sflag [#allocation5], %s329
        %s331 = sand.u32 %s117, 1
        %s332 = smul.addr %s331, 8
        %s333 = scalar_lea.vmem [#allocation6], %s332
        // Predicated region
        $region45: #{tpu_custom_call.1} parent=31 // pred_check
          %p334 = pneg %p127
        $region46: #{tpu_custom_call.1} parent=31 // pred_check_branch
          %336 = sbr.rel (%p334) target = $region48
        $region47: #{tpu_custom_call.1} parent=31 // pred_region
          %s338 = ssub.s32 128, 128
          %339 = vsyncadd %s330, %s338
          %s340 = smul.addr %s24, 128
          %s341 = scalar_lea.hbm %s3, %s340
          %s343 = sshll.u32 %s333, 4
          %s344 = int_to_ptr.vmem [resolvable:$true] %s343
          %346 = dma.vmem_to_hbm [thread:$0]  %s344, 128, %s341, %s330
        $region48: #{tpu_custom_call.1} parent=31 // pred_fallthru
          _
      $region32: #{tpu_custom_call.1} parent=5 // pred_fallthru
        _
      %p347 = scmp.le.s32.totalorder 2, %s15
      // Predicated region
      $region49: #{tpu_custom_call.1} parent=5 // pred_check
        %p348 = pneg %p347
      $region50: #{tpu_custom_call.1} parent=5 // pred_check_branch
        %350 = sbr.rel (%p348) target = $region52
      $region51: #{tpu_custom_call.1} parent=5 // pred_region
        %s351 = ssub.s32 %s15, 2
        // Predicated region
        $region53: #{tpu_custom_call.1} parent=51 // pred_check
          %p352 = pneg %p133
        $region54: #{tpu_custom_call.1} parent=51 // pred_check_branch
          %354 = sbr.rel (%p352) target = $region56
        $region55: #{tpu_custom_call.1} parent=51 // pred_region
          %s355 = sand.u32 %s118, 1
          %s356 = scalar_lea.sflag [#allocation5], %s355
          %s357 = sand.u32 %s118, 1
          %s358 = smul.addr %s357, 8
          %s359 = scalar_lea.vmem [#allocation6], %s358
          %360 = dma.done %s356, 128
        $region56: #{tpu_custom_call.1} parent=51 // pred_fallthru
          _
      $region52: #{tpu_custom_call.1} parent=5 // pred_fallthru
        _
    $region6: #{tpu_custom_call.1} parent=1 // loop_footer
      %s19 = sadd.s32 1, %s15
    $region7: #{tpu_custom_call.1} parent=1 // loop_footer_branch
      %14 = sbr.rel target = $region3
    $region8: #{tpu_custom_call.1} parent=1 // loop_exit
      _
    %361 = vsyncpa [#allocation4], 1
    %s362 = scalar_lea.sflag [#allocation4], 1
    %363 = vsyncpa %s362, 1
    %364 = vsyncpa [#allocation5], 1
    %s365 = scalar_lea.sflag [#allocation5], 1
    %366 = vsyncpa %s365, 1

</llo_original>
